<compile_context>
chip_gen: v7x
topology: tpu7x:2x2x1
jax: 0.10.0
libtpu: 0.0.40
codegen_flags: <defaults>
</compile_context>

<pallas_src>
import functools

import jax
import jax.numpy as jnp
from jax.experimental import pallas as pl
from jax.experimental.pallas import tpu as pltpu

LANE = 128  # TPU lane width; latent-sized tensors are padded to this for lane-dense I/O


def _round_up(x, m):
    return ((x + m - 1) // m) * m


def _vae_kernel(x_ref, w1e_ref, wh_ref, w1d_ref, w2d_ref, w3d_ref, bias_ref, eps_ref,
                xhat_ref, musig_ref, *, hidden, d_in, lp):
    f32 = jnp.float32
    bf16 = jnp.bfloat16

    # Packed biases + lane masks: one [7, max_width] f32 slab (static slices are free).
    b1e = bias_ref[0:1, :hidden]
    bh = bias_ref[1:2, :lp]
    b1d = bias_ref[2:3, :hidden]
    b2d = bias_ref[3:4, :hidden]
    b3d = bias_ref[4:5, :d_in]
    mask_mu = bias_ref[5:6, :lp]   # 1.0 on lanes [0, L), else 0
    mask_lv = bias_ref[6:7, :lp]   # 1.0 on lanes [L, 2L), else 0

    # ---- Encoder fc1 + sigmoid (bf16 MXU operands, f32 accumulation / activations) ----
    h = jnp.dot(x_ref[...], w1e_ref[...], preferred_element_type=f32) + b1e
    h = jax.nn.sigmoid(h)

    # ---- Fused mu / log_var heads: lanes [0,L) = mu, [L,2L) = log_var, rest = 0 ----
    head = jnp.dot(h.astype(bf16), wh_ref[...], preferred_element_type=f32) + bh

    mu_part = head * mask_mu                           # mu on [0,L), 0 elsewhere
    sigma_full = jnp.exp(0.5 * (head * mask_lv))       # sigma on [L,2L), 1 elsewhere

    # Lane-dense [mu | sigma | 0...] slab -> unmasked full-lane bf16 stores.
    musig_ref[...] = (mu_part + sigma_full * mask_lv).astype(musig_ref.dtype)

    # ---- Reparameterization, lane-packed: z_full = [mu | sigma*eps | 0] ----
    # eps carries noise only on lanes [L,2L) (zeros elsewhere); w1d_big duplicates the
    # decoder fc1 weight on rows [0,L) and [L,2L), so z_full @ w1d_big == (mu+sigma*eps) @ w1d.
    z_full = mu_part + sigma_full * eps_ref[...].astype(f32)

    # ---- Decoder ----
    d1 = jnp.dot(z_full.astype(bf16), w1d_ref[...], preferred_element_type=f32) + b1d
    d1 = jnp.maximum(d1, 0.0)
    d2 = jnp.dot(d1.astype(bf16), w2d_ref[...], preferred_element_type=f32) + b2d
    d2 = jnp.maximum(d2, 0.0)
    logits = jnp.dot(d2.astype(bf16), w3d_ref[...], preferred_element_type=f32) + b3d
    xhat_ref[...] = jax.nn.sigmoid(logits).astype(xhat_ref.dtype)


def autoencoder_forward(x, params, eps, *, block_rows=512):
    """x: [B, D_in] f32. params: weights stored [in, out], biases [1, out]. eps: [B, L]."""
    B, d_in = x.shape
    hidden = params["w1e"].shape[1]
    latent = params["wmu"].shape[1]
    lp = max(LANE, _round_up(2 * latent, LANE))  # padded width for fused head / mu|sigma slab

    f32, bf16 = jnp.float32, jnp.bfloat16

    # ---- one-time parameter packing (layout plumbing, outside the kernel) ----
    w_heads = (jnp.zeros((hidden, lp), f32)
               .at[:, :latent].set(params["wmu"])
               .at[:, latent:2 * latent].set(params["wls"]))
    w1d_big = (jnp.zeros((lp, hidden), f32)
               .at[:latent, :].set(params["w1d"])
               .at[latent:2 * latent, :].set(params["w1d"]))

    max_w = max(hidden, d_in, lp)
    bias_pack = (jnp.zeros((7, max_w), f32)
                 .at[0, :hidden].set(params["b1e"][0])
                 .at[1, :latent].set(params["bmu"][0])
                 .at[1, latent:2 * latent].set(params["bls"][0])
                 .at[2, :hidden].set(params["b1d"][0])
                 .at[3, :hidden].set(params["b2d"][0])
                 .at[4, :d_in].set(params["b3d"][0])
                 .at[5, :latent].set(1.0)                      # mask_mu
                 .at[6, latent:2 * latent].set(1.0))           # mask_lv

    # bf16 MXU operands (f32 accumulation happens inside the kernel).
    w1e_b = params["w1e"].astype(bf16)
    w_heads_b = w_heads.astype(bf16)
    w1d_big_b = w1d_big.astype(bf16)
    w2d_b = params["w2d"].astype(bf16)
    w3d_b = params["w3d"].astype(bf16)

    # eps placed on lanes [L, 2L) of a lane-dense bf16 slab (matches the kernel packing).
    eps_pad = jnp.zeros((B, lp), bf16).at[:, latent:2 * latent].set(eps.astype(bf16))
    x_b = x.astype(bf16)

    # ---- batch tiling ----
    # Tile is a multiple of 16 rows (bf16 (16,128) packing). If the grid would collapse
    # to a single step but the batch can be split, use two tiles so v7x's two
    # TensorCores both get work under dimension_semantics=("parallel",).
    tb = block_rows if B >= block_rows else _round_up(B, 16)
    if B >= 32 and -(-B // tb) == 1:
        tb = _round_up(-(-B // 2), 16)
    bp = _round_up(B, tb)
    if bp != B:
        x_b = jnp.pad(x_b, ((0, bp - B), (0, 0)))
        eps_pad = jnp.pad(eps_pad, ((0, bp - B), (0, 0)))
    grid = (bp // tb,)

    kernel = functools.partial(_vae_kernel, hidden=hidden, d_in=d_in, lp=lp)

    # NOTE: if profiling at tb>=512 shows exposed input DMA, add
    # pipeline_mode=pl.Buffered(3) to the x / eps row specs (weights stay default:
    # their index_map is constant so they are resident).
    def row_spec(cols):
        return pl.BlockSpec((tb, cols), lambda i: (i, 0))

    def const_spec(shape):
        return pl.BlockSpec(shape, lambda i: (0, 0))

    x_hat_p, musig = pl.pallas_call(
        kernel,
        out_shape=(jax.ShapeDtypeStruct((bp, d_in), bf16),   # bf16 writeback (mem-bound stream)
                   jax.ShapeDtypeStruct((bp, lp), bf16)),
        grid=grid,
        in_specs=[
            row_spec(d_in),                # x (bf16)
            const_spec((d_in, hidden)),    # encoder fc1 weight
            const_spec((hidden, lp)),      # fused mu|log_var head weight (padded)
            const_spec((lp, hidden)),      # decoder fc1 weight (lifted to padded latent)
            const_spec((hidden, hidden)),  # decoder fc2 weight
            const_spec((hidden, d_in)),    # decoder fc3 weight
            const_spec((7, max_w)),        # packed biases + lane masks
            row_spec(lp),                  # eps (lane-packed, bf16)
        ],
        out_specs=(row_spec(d_in), row_spec(lp)),
        compiler_params=pltpu.CompilerParams(dimension_semantics=("parallel",)),
    )(x_b, w1e_b, w_heads_b, w1d_big_b, w2d_b, w3d_b, bias_pack, eps_pad)

    # Cast back to f32 outside the kernel (drop if the caller can consume bf16).
    x_hat = x_hat_p[:B].astype(f32)
    mu = musig[:B, :latent].astype(f32)
    sigma = musig[:B, latent:2 * latent].astype(f32)
    return x_hat, mu, sigma


def init_params(key, d_in, hidden, latent):
    """torch.nn.Linear-style init (U[-1/sqrt(fan_in), 1/sqrt(fan_in)]); weights [in, out]."""
    def linear(k, fan_in, fan_out):
        kw, kb = jax.random.split(k)
        bound = 1.0 / jnp.sqrt(fan_in)
        w = jax.random.uniform(kw, (fan_in, fan_out), jnp.float32, -bound, bound)
        b = jax.random.uniform(kb, (1, fan_out), jnp.float32, -bound, bound)
        return w, b

    keys = jax.random.split(key, 6)
    p = {}
    p["w1e"], p["b1e"] = linear(keys[0], d_in, hidden)    # encoder fc1
    p["wls"], p["bls"] = linear(keys[1], hidden, latent)  # encoder to_log_squared_sigma
    p["wmu"], p["bmu"] = linear(keys[2], hidden, latent)  # encoder to_mu
    p["w1d"], p["b1d"] = linear(keys[3], latent, hidden)  # decoder fc1
    p["w2d"], p["b2d"] = linear(keys[4], hidden, hidden)  # decoder fc2
    p["w3d"], p["b3d"] = linear(keys[5], hidden, d_in)    # decoder fc3
    return p


def reference_forward(x, params, eps):
    """Pure-JAX f32 reference of the PyTorch module semantics."""
    h = jax.nn.sigmoid(x @ params["w1e"] + params["b1e"])
    log_var = h @ params["wls"] + params["bls"]
    mu = h @ params["wmu"] + params["bmu"]
    sigma = jnp.exp(0.5 * log_var)
    z = mu + sigma * eps
    d1 = jnp.maximum(z @ params["w1d"] + params["b1d"], 0.0)
    d2 = jnp.maximum(d1 @ params["w2d"] + params["b2d"], 0.0)
    x_hat = jax.nn.sigmoid(d2 @ params["w3d"] + params["b3d"])
    return x_hat, mu, sigma


if __name__ == "__main__":
    # Small, TPU-friendly shapes consistent with the module (flattened-image VAE).
    # B=32 exercises the grid-split path (grid=(2,), 16-row bf16-packed tiles).
    B, D_IN, HIDDEN, LATENT = 32, 256, 128, 32

    key = jax.random.PRNGKey(0)
    k_params, k_x, k_eps = jax.random.split(key, 3)

    params = init_params(k_params, D_IN, HIDDEN, LATENT)
    x = jax.random.uniform(k_x, (B, D_IN), jnp.float32)       # pixel-like inputs in [0,1)
    eps = jax.random.normal(k_eps, (B, LATENT), jnp.float32)  # torch.randn_like(sigma)

    x_hat, mu, sigma = autoencoder_forward(x, params, eps)
    jax.block_until_ready((x_hat, mu, sigma))

    # Correctness vs. pure-f32 reference; tolerance covers bf16 matmul operands and
    # bf16 output streams (f32 accumulation keeps errors at the ~1e-3..1e-2 level).
    x_hat_ref, mu_ref, sigma_ref = reference_forward(x, params, eps)
    assert x_hat.shape == (B, D_IN) and mu.shape == (B, LATENT) and sigma.shape == (B, LATENT)
    assert jnp.allclose(x_hat, x_hat_ref, atol=3e-2, rtol=3e-2)
    assert jnp.allclose(mu, mu_ref, atol=3e-2, rtol=3e-2)
    assert jnp.allclose(sigma, sigma_ref, atol=3e-2, rtol=3e-2)

    print("KERNEL_OK")
</pallas_src>

<mosaic_0001>
module attributes {stable_mosaic.version = 11 : i64} {
  func.func @_vae_kernel(%arg0: i32, %arg1: memref<16x256xbf16, #tpu.memory_space<vmem>>, %arg2: memref<256x128xbf16, #tpu.memory_space<vmem>>, %arg3: memref<128x128xbf16, #tpu.memory_space<vmem>>, %arg4: memref<128x128xbf16, #tpu.memory_space<vmem>>, %arg5: memref<128x128xbf16, #tpu.memory_space<vmem>>, %arg6: memref<128x256xbf16, #tpu.memory_space<vmem>>, %arg7: memref<7x256xf32, #tpu.memory_space<vmem>>, %arg8: memref<16x128xbf16, #tpu.memory_space<vmem>>, %arg9: memref<16x256xbf16, #tpu.memory_space<vmem>>, %arg10: memref<16x128xbf16, #tpu.memory_space<vmem>>) attributes {dimension_semantics = [#tpu.dimension_semantics<parallel>], iteration_bounds = array<i64: 2>, scalar_prefetch = 0 : i64, scratch_operands = 0 : i64, tpu.core_type = #tpu.core_type<tc>, window_params = [{transform_indices = @transform_0, window_bounds = array<i64: 16, 256>}, {pipeline_mode = #tpu.pipeline_mode<synchronous>, transform_indices = @transform_1, window_bounds = array<i64: 256, 128>}, {pipeline_mode = #tpu.pipeline_mode<synchronous>, transform_indices = @transform_2, window_bounds = array<i64: 128, 128>}, {pipeline_mode = #tpu.pipeline_mode<synchronous>, transform_indices = @transform_3, window_bounds = array<i64: 128, 128>}, {pipeline_mode = #tpu.pipeline_mode<synchronous>, transform_indices = @transform_4, window_bounds = array<i64: 128, 128>}, {pipeline_mode = #tpu.pipeline_mode<synchronous>, transform_indices = @transform_5, window_bounds = array<i64: 128, 256>}, {pipeline_mode = #tpu.pipeline_mode<synchronous>, transform_indices = @transform_6, window_bounds = array<i64: 7, 256>}, {transform_indices = @transform_7, window_bounds = array<i64: 16, 128>}, {transform_indices = @transform_8, window_bounds = array<i64: 16, 256>}, {transform_indices = @transform_9, window_bounds = array<i64: 16, 128>}]} {
    %c0 = arith.constant 0 : index
    %c0_0 = arith.constant 0 : index
    %0 = vector.load %arg7[%c0, %c0_0] : memref<7x256xf32, #tpu.memory_space<vmem>>, vector<1x128xf32>
    %c1 = arith.constant 1 : index
    %c0_1 = arith.constant 0 : index
    %1 = vector.load %arg7[%c1, %c0_1] : memref<7x256xf32, #tpu.memory_space<vmem>>, vector<1x128xf32>
    %c2 = arith.constant 2 : index
    %c0_2 = arith.constant 0 : index
    %2 = vector.load %arg7[%c2, %c0_2] : memref<7x256xf32, #tpu.memory_space<vmem>>, vector<1x128xf32>
    %c3 = arith.constant 3 : index
    %c0_3 = arith.constant 0 : index
    %3 = vector.load %arg7[%c3, %c0_3] : memref<7x256xf32, #tpu.memory_space<vmem>>, vector<1x128xf32>
    %c4 = arith.constant 4 : index
    %c0_4 = arith.constant 0 : index
    %4 = vector.load %arg7[%c4, %c0_4] : memref<7x256xf32, #tpu.memory_space<vmem>>, vector<1x256xf32>
    %c5 = arith.constant 5 : index
    %c0_5 = arith.constant 0 : index
    %5 = vector.load %arg7[%c5, %c0_5] : memref<7x256xf32, #tpu.memory_space<vmem>>, vector<1x128xf32>
    %c6 = arith.constant 6 : index
    %c0_6 = arith.constant 0 : index
    %6 = vector.load %arg7[%c6, %c0_6] : memref<7x256xf32, #tpu.memory_space<vmem>>, vector<1x128xf32>
    %c0_7 = arith.constant 0 : index
    %c0_8 = arith.constant 0 : index
    %7 = vector.load %arg1[%c0_7, %c0_8] : memref<16x256xbf16, #tpu.memory_space<vmem>>, vector<16x256xbf16>
    %c0_9 = arith.constant 0 : index
    %c0_10 = arith.constant 0 : index
    %8 = vector.load %arg2[%c0_9, %c0_10] : memref<256x128xbf16, #tpu.memory_space<vmem>>, vector<256x128xbf16>
    %cst = arith.constant dense<0.000000e+00> : vector<16x128xf32>
    %9 = tpu.matmul %7, %8, %cst {dimension_numbers = #tpu.dot_dimension_numbers<[1], [0], [0], [1], [0, 0, 1, 1], [], []>} : vector<16x256xbf16>, vector<256x128xbf16>, vector<16x128xf32> -> vector<16x128xf32>
    %10 = vector.broadcast %0 : vector<1x128xf32> to vector<16x128xf32>
    %11 = arith.addf %9, %10 : vector<16x128xf32>
    %12 = arith.negf %11 : vector<16x128xf32>
    %13 = math.exp %12 : vector<16x128xf32>
    %cst_11 = arith.constant 1.000000e+00 : f32
    %14 = vector.broadcast %cst_11 : f32 to vector<16x128xf32>
    %15 = arith.addf %14, %13 : vector<16x128xf32>
    %16 = arith.divf %14, %15 : vector<16x128xf32>
    %17 = arith.truncf %16 : vector<16x128xf32> to vector<16x128xbf16>
    %c0_12 = arith.constant 0 : index
    %c0_13 = arith.constant 0 : index
    %18 = vector.load %arg3[%c0_12, %c0_13] : memref<128x128xbf16, #tpu.memory_space<vmem>>, vector<128x128xbf16>
    %cst_14 = arith.constant dense<0.000000e+00> : vector<16x128xf32>
    %19 = tpu.matmul %17, %18, %cst_14 {dimension_numbers = #tpu.dot_dimension_numbers<[1], [0], [0], [1], [0, 0, 1, 1], [], []>} : vector<16x128xbf16>, vector<128x128xbf16>, vector<16x128xf32> -> vector<16x128xf32>
    %20 = vector.broadcast %1 : vector<1x128xf32> to vector<16x128xf32>
    %21 = arith.addf %19, %20 : vector<16x128xf32>
    %22 = vector.broadcast %5 : vector<1x128xf32> to vector<16x128xf32>
    %23 = arith.mulf %21, %22 : vector<16x128xf32>
    %24 = vector.broadcast %6 : vector<1x128xf32> to vector<16x128xf32>
    %25 = arith.mulf %21, %24 : vector<16x128xf32>
    %cst_15 = arith.constant 5.000000e-01 : f32
    %26 = vector.broadcast %cst_15 : f32 to vector<16x128xf32>
    %27 = arith.mulf %26, %25 : vector<16x128xf32>
    %28 = math.exp %27 : vector<16x128xf32>
    %29 = vector.broadcast %6 : vector<1x128xf32> to vector<16x128xf32>
    %30 = arith.mulf %28, %29 : vector<16x128xf32>
    %31 = arith.addf %23, %30 : vector<16x128xf32>
    %32 = arith.truncf %31 : vector<16x128xf32> to vector<16x128xbf16>
    %c0_16 = arith.constant 0 : index
    %c0_17 = arith.constant 0 : index
    %33 = vector.load %arg10[%c0_16, %c0_17] : memref<16x128xbf16, #tpu.memory_space<vmem>>, vector<16x128xbf16>
    tpu.vector_store %arg10[%c0_16, %c0_17], %32 {strides = array<i32>} : memref<16x128xbf16, #tpu.memory_space<vmem>>, vector<16x128xbf16>,
    %c0_18 = arith.constant 0 : index
    %c0_19 = arith.constant 0 : index
    %34 = vector.load %arg8[%c0_18, %c0_19] : memref<16x128xbf16, #tpu.memory_space<vmem>>, vector<16x128xbf16>
    %35 = arith.extf %34 : vector<16x128xbf16> to vector<16x128xf32>
    %36 = arith.mulf %28, %35 : vector<16x128xf32>
    %37 = arith.addf %23, %36 : vector<16x128xf32>
    %38 = arith.truncf %37 : vector<16x128xf32> to vector<16x128xbf16>
    %c0_20 = arith.constant 0 : index
    %c0_21 = arith.constant 0 : index
    %39 = vector.load %arg4[%c0_20, %c0_21] : memref<128x128xbf16, #tpu.memory_space<vmem>>, vector<128x128xbf16>
    %cst_22 = arith.constant dense<0.000000e+00> : vector<16x128xf32>
    %40 = tpu.matmul %38, %39, %cst_22 {dimension_numbers = #tpu.dot_dimension_numbers<[1], [0], [0], [1], [0, 0, 1, 1], [], []>} : vector<16x128xbf16>, vector<128x128xbf16>, vector<16x128xf32> -> vector<16x128xf32>
    %41 = vector.broadcast %2 : vector<1x128xf32> to vector<16x128xf32>
    %42 = arith.addf %40, %41 : vector<16x128xf32>
    %cst_23 = arith.constant 0.000000e+00 : f32
    %43 = vector.broadcast %cst_23 : f32 to vector<16x128xf32>
    %44 = arith.maximumf %42, %43 : vector<16x128xf32>
    %45 = arith.truncf %44 : vector<16x128xf32> to vector<16x128xbf16>
    %c0_24 = arith.constant 0 : index
    %c0_25 = arith.constant 0 : index
    %46 = vector.load %arg5[%c0_24, %c0_25] : memref<128x128xbf16, #tpu.memory_space<vmem>>, vector<128x128xbf16>
    %cst_26 = arith.constant dense<0.000000e+00> : vector<16x128xf32>
    %47 = tpu.matmul %45, %46, %cst_26 {dimension_numbers = #tpu.dot_dimension_numbers<[1], [0], [0], [1], [0, 0, 1, 1], [], []>} : vector<16x128xbf16>, vector<128x128xbf16>, vector<16x128xf32> -> vector<16x128xf32>
    %48 = vector.broadcast %3 : vector<1x128xf32> to vector<16x128xf32>
    %49 = arith.addf %47, %48 : vector<16x128xf32>
    %cst_27 = arith.constant 0.000000e+00 : f32
    %50 = vector.broadcast %cst_27 : f32 to vector<16x128xf32>
    %51 = arith.maximumf %49, %50 : vector<16x128xf32>
    %52 = arith.truncf %51 : vector<16x128xf32> to vector<16x128xbf16>
    %c0_28 = arith.constant 0 : index
    %c0_29 = arith.constant 0 : index
    %53 = vector.load %arg6[%c0_28, %c0_29] : memref<128x256xbf16, #tpu.memory_space<vmem>>, vector<128x256xbf16>
    %cst_30 = arith.constant dense<0.000000e+00> : vector<16x256xf32>
    %54 = tpu.matmul %52, %53, %cst_30 {dimension_numbers = #tpu.dot_dimension_numbers<[1], [0], [0], [1], [0, 0, 1, 1], [], []>} : vector<16x128xbf16>, vector<128x256xbf16>, vector<16x256xf32> -> vector<16x256xf32>
    %55 = vector.broadcast %4 : vector<1x256xf32> to vector<16x256xf32>
    %56 = arith.addf %54, %55 : vector<16x256xf32>
    %57 = arith.negf %56 : vector<16x256xf32>
    %58 = math.exp %57 : vector<16x256xf32>
    %cst_31 = arith.constant 1.000000e+00 : f32
    %59 = vector.broadcast %cst_31 : f32 to vector<16x256xf32>
    %60 = arith.addf %59, %58 : vector<16x256xf32>
    %61 = arith.divf %59, %60 : vector<16x256xf32>
    %62 = arith.truncf %61 : vector<16x256xf32> to vector<16x256xbf16>
    %c0_32 = arith.constant 0 : index
    %c0_33 = arith.constant 0 : index
    %63 = vector.load %arg9[%c0_32, %c0_33] : memref<16x256xbf16, #tpu.memory_space<vmem>>, vector<16x256xbf16>
    tpu.vector_store %arg9[%c0_32, %c0_33], %62 {strides = array<i32>} : memref<16x256xbf16, #tpu.memory_space<vmem>>, vector<16x256xbf16>,
    return
  }
  func.func @transform_0(%arg0: i32) -> (i32, i32) {
    %c0_i32 = arith.constant 0 : i32
    %c0_i32_0 = arith.constant 0 : i32
    return %arg0, %c0_i32 : i32, i32
  }
  func.func @transform_1(%arg0: i32) -> (i32, i32) {
    %c0_i32 = arith.constant 0 : i32
    %c0_i32_0 = arith.constant 0 : i32
    %c0_i32_1 = arith.constant 0 : i32
    return %c0_i32, %c0_i32_0 : i32, i32
  }
  func.func @transform_2(%arg0: i32) -> (i32, i32) {
    %c0_i32 = arith.constant 0 : i32
    %c0_i32_0 = arith.constant 0 : i32
    %c0_i32_1 = arith.constant 0 : i32
    return %c0_i32, %c0_i32_0 : i32, i32
  }
  func.func @transform_3(%arg0: i32) -> (i32, i32) {
    %c0_i32 = arith.constant 0 : i32
    %c0_i32_0 = arith.constant 0 : i32
    %c0_i32_1 = arith.constant 0 : i32
    return %c0_i32, %c0_i32_0 : i32, i32
  }
  func.func @transform_4(%arg0: i32) -> (i32, i32) {
    %c0_i32 = arith.constant 0 : i32
    %c0_i32_0 = arith.constant 0 : i32
    %c0_i32_1 = arith.constant 0 : i32
    return %c0_i32, %c0_i32_0 : i32, i32
  }
  func.func @transform_5(%arg0: i32) -> (i32, i32) {
    %c0_i32 = arith.constant 0 : i32
    %c0_i32_0 = arith.constant 0 : i32
    %c0_i32_1 = arith.constant 0 : i32
    return %c0_i32, %c0_i32_0 : i32, i32
  }
  func.func @transform_6(%arg0: i32) -> (i32, i32) {
    %c0_i32 = arith.constant 0 : i32
    %c0_i32_0 = arith.constant 0 : i32
    %c0_i32_1 = arith.constant 0 : i32
    return %c0_i32, %c0_i32_0 : i32, i32
  }
  func.func @transform_7(%arg0: i32) -> (i32, i32) {
    %c0_i32 = arith.constant 0 : i32
    %c0_i32_0 = arith.constant 0 : i32
    return %arg0, %c0_i32 : i32, i32
  }
  func.func @transform_8(%arg0: i32) -> (i32, i32) {
    %c0_i32 = arith.constant 0 : i32
    %c0_i32_0 = arith.constant 0 : i32
    return %arg0, %c0_i32 : i32, i32
  }
  func.func @transform_9(%arg0: i32) -> (i32, i32) {
    %c0_i32 = arith.constant 0 : i32
    %c0_i32_0 = arith.constant 0 : i32
    return %arg0, %c0_i32 : i32, i32
  }
}

</mosaic_0001>

<llo_original>
// kernel: tpu_custom_call.1
$region0: #{tpu_custom_call.1}
  #allocation0 [shape = 'u32[]', space=smem, size = 0x4, offset = 0x4, fixed_abs, tag = 'smem constant byte address 0x4 - core index']
  #allocation1 [shape = 'u32[144,128]{1,0:T(1,128)}', space=vmem, size = 0x12000, scoped, tag = 'internal scratch']
  %s0 = inlined_call_operand.hbm [shape: bf16[32,256], index: 0, kind: input, shape index: {}]
  %s1 = inlined_call_operand.hbm [shape: bf16[256,128], index: 1, kind: input, shape index: {}]
  %s2 = inlined_call_operand.hbm [shape: bf16[128,128], index: 2, kind: input, shape index: {}]
  %s3 = inlined_call_operand.hbm [shape: bf16[128,128], index: 3, kind: input, shape index: {}]
  %s4 = inlined_call_operand.hbm [shape: bf16[128,128], index: 4, kind: input, shape index: {}]
  %s5 = inlined_call_operand.hbm [shape: bf16[128,256], index: 5, kind: input, shape index: {}]
  %s6 = inlined_call_operand.vmem [shape: f32[7,256], index: 6, kind: input, shape index: {}]
  %s7 = inlined_call_operand.hbm [shape: bf16[32,128], index: 7, kind: input, shape index: {}]
  %s8 = inlined_call_operand.hbm [shape: bf16[32,256], index: 8, kind: output, shape index: {0}]
  %s9 = inlined_call_operand.hbm [shape: bf16[32,128], index: 9, kind: output, shape index: {1}]
  %10 = xla_tuple %s8, %s9
  %s11 = sld [smem:[#allocation0]]
  $region101: #{tpu_custom_call.1} parent=0
    _
  %s13 = ssub.s32 1, %s11
  %s14 = scalar_select 0, %s13, %s11
  $region1: #{tpu_custom_call.1} parent=0
    #allocation2 [shape = 'u8[16384]{0}', space=vmem, size = 0x4000, scoped, tag = 'input window, operand 0']
    #allocation3 [shape = 's32[2]{0}', space=sflag, size = 0x8, scoped, tag = 'scoped memory for tpu_custom_call.1']
    #allocation4 [shape = 's32[2]{0}', space=sflag, size = 0x8, scoped, tag = 'scoped memory for tpu_custom_call.1']
    #allocation5 [shape = 'u8[65536]{0}', space=vmem, size = 0x10000, scoped, tag = 'input window, operand 1, single buffered']
    #allocation6 [shape = 's32[1]{0}', space=sflag, size = 0x4, scoped, tag = 'scoped memory for tpu_custom_call.1']
    #allocation7 [shape = 'u8[32768]{0}', space=vmem, size = 0x8000, scoped, tag = 'input window, operand 2, single buffered']
    #allocation8 [shape = 'u8[32768]{0}', space=vmem, size = 0x8000, scoped, tag = 'input window, operand 3, single buffered']
    #allocation9 [shape = 's32[1]{0}', space=sflag, size = 0x4, scoped, tag = 'scoped memory for tpu_custom_call.1']
    #allocation10 [shape = 'u8[32768]{0}', space=vmem, size = 0x8000, scoped, tag = 'input window, operand 4, single buffered']
    #allocation11 [shape = 'u8[65536]{0}', space=vmem, size = 0x10000, scoped, tag = 'input window, operand 5, single buffered']
    #allocation12 [shape = 's32[1]{0}', space=sflag, size = 0x4, scoped, tag = 'scoped memory for tpu_custom_call.1']
    #allocation13 [shape = 'u8[8192]{0}', space=vmem, size = 0x2000, scoped, tag = 'input window, operand 7']
    #allocation14 [shape = 'u8[16384]{0}', space=vmem, size = 0x4000, scoped, tag = 'output window, operand 0']
    #allocation15 [shape = 'u8[8192]{0}', space=vmem, size = 0x2000, scoped, tag = 'output window, operand 1']
    #allocation16 [shape = 's32[2]{0}', space=sflag, size = 0x8, scoped, tag = 'scoped memory for tpu_custom_call.1']
    %15 = vsyncpa [#allocation3], 0
    %s16 = scalar_lea.sflag [#allocation3], 1
    %17 = vsyncpa %s16, 0
    %18 = vsyncpa [#allocation6], 0
    %19 = vsyncpa [#allocation9], 0
    %20 = vsyncpa [#allocation12], 0
    %21 = vsyncpa [#allocation4], 0
    %s22 = scalar_lea.sflag [#allocation4], 1
    %23 = vsyncpa %s22, 0
    %24 = vsyncpa [#allocation16], 0
    %s25 = scalar_lea.sflag [#allocation16], 1
    %26 = vsyncpa %s25, 0
    loop: start=0, step=1, limit=4
    $region2: #{tpu_custom_call.1} parent=1 // loop_pre_header
      _
    $region3: #{tpu_custom_call.1} parent=1 // loop_header
      %s28 = sphi 0, %s32
      %p29 = scmp.ge.s32.totalorder %s28, 4
      %s38 = sphi 0, %s40
      %s41 = sphi 0, %s38
      %s42 = sphi 0, %s41
      %s58 = sphi 0, %s42
      %s62 = sphi 0, %s62
      %s64 = sphi 0, %s62
      %s65 = sphi 0, %s64
      %s79 = sphi 0, %s65
      %s83 = sphi 0, %s83
      %s85 = sphi 0, %s83
      %s86 = sphi 0, %s85
      %s100 = sphi 0, %s86
      %s104 = sphi 0, %s104
      %s106 = sphi 0, %s104
      %s107 = sphi 0, %s106
      %s121 = sphi 0, %s107
      %s125 = sphi 0, %s125
      %s127 = sphi 0, %s125
      %s128 = sphi 0, %s127
      %s142 = sphi 0, %s128
      %s146 = sphi 0, %s146
      %s148 = sphi 0, %s146
      %s149 = sphi 0, %s148
      %s163 = sphi 0, %s149
      %s167 = sphi 0, %s167
      %s169 = sphi 0, %s167
      %s170 = sphi 0, %s169
      %s184 = sphi 0, %s170
      %s190 = sphi 0, %s192
      %s193 = sphi 0, %s190
      %s194 = sphi 0, %s193
      %s210 = sphi 0, %s194
      %s216 = sphi 0, %s218
      %s219 = sphi 0, %s216
      %s220 = sphi 0, %s219
      %s236 = sphi 0, %s220
      %s242 = sphi 0, %s244
      %s245 = sphi 0, %s242
      %s246 = sphi 0, %s245
      %s262 = sphi 0, %s246
    $region4: #{tpu_custom_call.1} parent=1 // loop_header_branch
      %31 = sbr.rel (%p29) target = $region8
    $region5: #{tpu_custom_call.1} parent=1 // loop_body
      %s33 = ssub.s32 %s28, 1
      %s34 = ssub.s32 %s28, 2
      %s35 = sadd.s32 %s28, 1
      %s36 = ssub.s32 %s28, %s35
      %p37 = scmp.eq.s32.totalorder %s36, 0
      %s39 = sadd.s32 %s38, 1
      %s40 = scalar_select %p37, %s38, %s39
      %p43 = pneg %p37
      %p44 = scmp.eq.s32.totalorder %s28, 1
      %p45 = por %p43, %p44
      %p46 = scmp.ne.s32.totalorder %s38, %s41
      %p47 = scmp.eq.s32.totalorder %s28, 0
      %p48 = por %p46, %p47
      %p49 = scmp.ne.s32.totalorder %s38, %s41
      %p50 = scmp.eq.s32.totalorder %s33, 1
      %p51 = por %p49, %p50
      %p52 = scmp.ne.s32.totalorder %s41, %s42
      %p53 = scmp.eq.s32.totalorder %s33, 0
      %p54 = por %p52, %p53
      %p55 = scmp.ne.s32.totalorder %s41, %s42
      %p56 = scmp.eq.s32.totalorder %s34, 1
      %p57 = por %p55, %p56
      %p59 = scmp.ne.s32.totalorder %s42, %s58
      %p60 = scmp.eq.s32.totalorder %s34, 0
      %p61 = por %p59, %p60
      %s63 = sadd.s32 %s62, 1
      %p66 = scmp.eq.s32.totalorder %s28, 1
      %p67 = scmp.ne.s32.totalorder %s62, %s64
      %p68 = scmp.eq.s32.totalorder %s28, 0
      %p69 = por %p67, %p68
      %p70 = scmp.ne.s32.totalorder %s62, %s64
      %p71 = scmp.eq.s32.totalorder %s33, 1
      %p72 = por %p70, %p71
      %p73 = scmp.ne.s32.totalorder %s64, %s65
      %p74 = scmp.eq.s32.totalorder %s33, 0
      %p75 = por %p73, %p74
      %p76 = scmp.ne.s32.totalorder %s64, %s65
      %p77 = scmp.eq.s32.totalorder %s34, 1
      %p78 = por %p76, %p77
      %p80 = scmp.ne.s32.totalorder %s65, %s79
      %p81 = scmp.eq.s32.totalorder %s34, 0
      %p82 = por %p80, %p81
      %s84 = sadd.s32 %s83, 1
      %p87 = scmp.eq.s32.totalorder %s28, 1
      %p88 = scmp.ne.s32.totalorder %s83, %s85
      %p89 = scmp.eq.s32.totalorder %s28, 0
      %p90 = por %p88, %p89
      %p91 = scmp.ne.s32.totalorder %s83, %s85
      %p92 = scmp.eq.s32.totalorder %s33, 1
      %p93 = por %p91, %p92
      %p94 = scmp.ne.s32.totalorder %s85, %s86
      %p95 = scmp.eq.s32.totalorder %s33, 0
      %p96 = por %p94, %p95
      %p97 = scmp.ne.s32.totalorder %s85, %s86
      %p98 = scmp.eq.s32.totalorder %s34, 1
      %p99 = por %p97, %p98
      %p101 = scmp.ne.s32.totalorder %s86, %s100
      %p102 = scmp.eq.s32.totalorder %s34, 0
      %p103 = por %p101, %p102
      %s105 = sadd.s32 %s104, 1
      %p108 = scmp.eq.s32.totalorder %s28, 1
      %p109 = scmp.ne.s32.totalorder %s104, %s106
      %p110 = scmp.eq.s32.totalorder %s28, 0
      %p111 = por %p109, %p110
      %p112 = scmp.ne.s32.totalorder %s104, %s106
      %p113 = scmp.eq.s32.totalorder %s33, 1
      %p114 = por %p112, %p113
      %p115 = scmp.ne.s32.totalorder %s106, %s107
      %p116 = scmp.eq.s32.totalorder %s33, 0
      %p117 = por %p115, %p116
      %p118 = scmp.ne.s32.totalorder %s106, %s107
      %p119 = scmp.eq.s32.totalorder %s34, 1
      %p120 = por %p118, %p119
      %p122 = scmp.ne.s32.totalorder %s107, %s121
      %p123 = scmp.eq.s32.totalorder %s34, 0
      %p124 = por %p122, %p123
      %s126 = sadd.s32 %s125, 1
      %p129 = scmp.eq.s32.totalorder %s28, 1
      %p130 = scmp.ne.s32.totalorder %s125, %s127
      %p131 = scmp.eq.s32.totalorder %s28, 0
      %p132 = por %p130, %p131
      %p133 = scmp.ne.s32.totalorder %s125, %s127
      %p134 = scmp.eq.s32.totalorder %s33, 1
      %p135 = por %p133, %p134
      %p136 = scmp.ne.s32.totalorder %s127, %s128
      %p137 = scmp.eq.s32.totalorder %s33, 0
      %p138 = por %p136, %p137
      %p139 = scmp.ne.s32.totalorder %s127, %s128
      %p140 = scmp.eq.s32.totalorder %s34, 1
      %p141 = por %p139, %p140
      %p143 = scmp.ne.s32.totalorder %s128, %s142
      %p144 = scmp.eq.s32.totalorder %s34, 0
      %p145 = por %p143, %p144
      %s147 = sadd.s32 %s146, 1
      %p150 = scmp.eq.s32.totalorder %s28, 1
      %p151 = scmp.ne.s32.totalorder %s146, %s148
      %p152 = scmp.eq.s32.totalorder %s28, 0
      %p153 = por %p151, %p152
      %p154 = scmp.ne.s32.totalorder %s146, %s148
      %p155 = scmp.eq.s32.totalorder %s33, 1
      %p156 = por %p154, %p155
      %p157 = scmp.ne.s32.totalorder %s148, %s149
      %p158 = scmp.eq.s32.totalorder %s33, 0
      %p159 = por %p157, %p158
      %p160 = scmp.ne.s32.totalorder %s148, %s149
      %p161 = scmp.eq.s32.totalorder %s34, 1
      %p162 = por %p160, %p161
      %p164 = scmp.ne.s32.totalorder %s149, %s163
      %p165 = scmp.eq.s32.totalorder %s34, 0
      %p166 = por %p164, %p165
      %s168 = sadd.s32 %s167, 1
      %p171 = scmp.eq.s32.totalorder %s28, 1
      %p172 = scmp.ne.s32.totalorder %s167, %s169
      %p173 = scmp.eq.s32.totalorder %s28, 0
      %p174 = por %p172, %p173
      %p175 = scmp.ne.s32.totalorder %s167, %s169
      %p176 = scmp.eq.s32.totalorder %s33, 1
      %p177 = por %p175, %p176
      %p178 = scmp.ne.s32.totalorder %s169, %s170
      %p179 = scmp.eq.s32.totalorder %s33, 0
      %p180 = por %p178, %p179
      %p181 = scmp.ne.s32.totalorder %s169, %s170
      %p182 = scmp.eq.s32.totalorder %s34, 1
      %p183 = por %p181, %p182
      %p185 = scmp.ne.s32.totalorder %s170, %s184
      %p186 = scmp.eq.s32.totalorder %s34, 0
      %p187 = por %p185, %p186
      %s188 = ssub.s32 %s28, %s35
      %p189 = scmp.eq.s32.totalorder %s188, 0
      %s191 = sadd.s32 %s190, 1
      %s192 = scalar_select %p189, %s190, %s191
      %p195 = pneg %p189
      %p196 = scmp.eq.s32.totalorder %s28, 1
      %p197 = por %p195, %p196
      %p198 = scmp.ne.s32.totalorder %s190, %s193
      %p199 = scmp.eq.s32.totalorder %s28, 0
      %p200 = por %p198, %p199
      %p201 = scmp.ne.s32.totalorder %s190, %s193
      %p202 = scmp.eq.s32.totalorder %s33, 1
      %p203 = por %p201, %p202
      %p204 = scmp.ne.s32.totalorder %s193, %s194
      %p205 = scmp.eq.s32.totalorder %s33, 0
      %p206 = por %p204, %p205
      %p207 = scmp.ne.s32.totalorder %s193, %s194
      %p208 = scmp.eq.s32.totalorder %s34, 1
      %p209 = por %p207, %p208
      %p211 = scmp.ne.s32.totalorder %s194, %s210
      %p212 = scmp.eq.s32.totalorder %s34, 0
      %p213 = por %p211, %p212
      %s214 = ssub.s32 %s28, %s35
      %p215 = scmp.eq.s32.totalorder %s214, 0
      %s217 = sadd.s32 %s216, 1
      %s218 = scalar_select %p215, %s216, %s217
      %p221 = pneg %p215
      %p222 = scmp.eq.s32.totalorder %s28, 1
      %p223 = por %p221, %p222
      %p224 = scmp.ne.s32.totalorder %s216, %s219
      %p225 = scmp.eq.s32.totalorder %s28, 0
      %p226 = por %p224, %p225
      %p227 = scmp.ne.s32.totalorder %s216, %s219
      %p228 = scmp.eq.s32.totalorder %s33, 1
      %p229 = por %p227, %p228
      %p230 = scmp.ne.s32.totalorder %s219, %s220
      %p231 = scmp.eq.s32.totalorder %s33, 0
      %p232 = por %p230, %p231
      %p233 = scmp.ne.s32.totalorder %s219, %s220
      %p234 = scmp.eq.s32.totalorder %s34, 1
      %p235 = por %p233, %p234
      %p237 = scmp.ne.s32.totalorder %s220, %s236
      %p238 = scmp.eq.s32.totalorder %s34, 0
      %p239 = por %p237, %p238
      %s240 = ssub.s32 %s28, %s35
      %p241 = scmp.eq.s32.totalorder %s240, 0
      %s243 = sadd.s32 %s242, 1
      %s244 = scalar_select %p241, %s242, %s243
      %p247 = pneg %p241
      %p248 = scmp.eq.s32.totalorder %s28, 1
      %p249 = por %p247, %p248
      %p250 = scmp.ne.s32.totalorder %s242, %s245
      %p251 = scmp.eq.s32.totalorder %s28, 0
      %p252 = por %p250, %p251
      %p253 = scmp.ne.s32.totalorder %s242, %s245
      %p254 = scmp.eq.s32.totalorder %s33, 1
      %p255 = por %p253, %p254
      %p256 = scmp.ne.s32.totalorder %s245, %s246
      %p257 = scmp.eq.s32.totalorder %s33, 0
      %p258 = por %p256, %p257
      %p259 = scmp.ne.s32.totalorder %s245, %s246
      %p260 = scmp.eq.s32.totalorder %s34, 1
      %p261 = por %p259, %p260
      %p263 = scmp.ne.s32.totalorder %s246, %s262
      %p264 = scmp.eq.s32.totalorder %s34, 0
      %p265 = por %p263, %p264
      %p266 = scmp.le.s32.totalorder 1, %s28
      %p267 = scmp.lt.s32.totalorder %s28, 3
      %p268 = pnand %p266, %p267
      %p269 = pneg %p268
      // Predicated region
      $region9: #{tpu_custom_call.1} parent=5 // pred_check
        _
      $region10: #{tpu_custom_call.1} parent=5 // pred_check_branch
        %271 = sbr.rel (%p268) target = $region12
      $region11: #{tpu_custom_call.1} parent=5 // pred_region
        %s272 = ssub.s32 %s28, 1
        // Predicated region
        $region13: #{tpu_custom_call.1} parent=11 // pred_check
          %p273 = pneg %p75
        $region14: #{tpu_custom_call.1} parent=11 // pred_check_branch
          %275 = sbr.rel (%p273) target = $region16
        $region15: #{tpu_custom_call.1} parent=11 // pred_region
          %s277 = ssub.s32 2048, 2048
          %278 = vsyncadd [#allocation6], %s277
          %s279 = sshll.u32 [#allocation5], 4
          %s280 = int_to_ptr.vmem [resolvable:$true] %s279
          %285 = dma.hbm_to_vmem [thread:$0]  %s1, 2048, %s280, [#allocation6], 64, 64, 4
        $region16: #{tpu_custom_call.1} parent=11 // pred_fallthru
          _
        // Predicated region
        $region17: #{tpu_custom_call.1} parent=11 // pred_check
          %p286 = pneg %p96
        $region18: #{tpu_custom_call.1} parent=11 // pred_check_branch
          %288 = sbr.rel (%p286) target = $region20
        $region19: #{tpu_custom_call.1} parent=11 // pred_region
          %s290 = ssub.s32 1024, 1024
          %291 = vsyncadd [#allocation6], %s290
          %s292 = sshll.u32 [#allocation7], 4
          %s293 = int_to_ptr.vmem [resolvable:$true] %s292
          %298 = dma.hbm_to_vmem [thread:$0]  %s2, 1024, %s293, [#allocation6], 64, 64, 4
        $region20: #{tpu_custom_call.1} parent=11 // pred_fallthru
          _
        // Predicated region
        $region21: #{tpu_custom_call.1} parent=11 // pred_check
          %p299 = pneg %p117
        $region22: #{tpu_custom_call.1} parent=11 // pred_check_branch
          %301 = sbr.rel (%p299) target = $region24
        $region23: #{tpu_custom_call.1} parent=11 // pred_region
          %s303 = ssub.s32 1024, 1024
          %304 = vsyncadd [#allocation9], %s303
          %s305 = sshll.u32 [#allocation8], 4
          %s306 = int_to_ptr.vmem [resolvable:$true] %s305
          %311 = dma.hbm_to_vmem [thread:$0]  %s3, 1024, %s306, [#allocation9], 64, 64, 4
        $region24: #{tpu_custom_call.1} parent=11 // pred_fallthru
          _
        // Predicated region
        $region25: #{tpu_custom_call.1} parent=11 // pred_check
          %p312 = pneg %p138
        $region26: #{tpu_custom_call.1} parent=11 // pred_check_branch
          %314 = sbr.rel (%p312) target = $region28
        $region27: #{tpu_custom_call.1} parent=11 // pred_region
          %s316 = ssub.s32 1024, 1024
          %317 = vsyncadd [#allocation9], %s316
          %s318 = sshll.u32 [#allocation10], 4
          %s319 = int_to_ptr.vmem [resolvable:$true] %s318
          %324 = dma.hbm_to_vmem [thread:$0]  %s4, 1024, %s319, [#allocation9], 64, 64, 4
        $region28: #{tpu_custom_call.1} parent=11 // pred_fallthru
          _
        // Predicated region
        $region29: #{tpu_custom_call.1} parent=11 // pred_check
          %p325 = pneg %p159
        $region30: #{tpu_custom_call.1} parent=11 // pred_check_branch
          %327 = sbr.rel (%p325) target = $region32
        $region31: #{tpu_custom_call.1} parent=11 // pred_region
          %s329 = ssub.s32 2048, 2048
          %330 = vsyncadd [#allocation12], %s329
          %s331 = sshll.u32 [#allocation11], 4
          %s332 = int_to_ptr.vmem [resolvable:$true] %s331
          %337 = dma.hbm_to_vmem [thread:$0]  %s5, 2048, %s332, [#allocation12], 128, 128, 8
        $region32: #{tpu_custom_call.1} parent=11 // pred_fallthru
          _
        // Predicated region
        $region33: #{tpu_custom_call.1} parent=11 // pred_check
          %p338 = pneg %p180
        $region34: #{tpu_custom_call.1} parent=11 // pred_check_branch
          %340 = sbr.rel (%p338) target = $region36
        $region35: #{tpu_custom_call.1} parent=11 // pred_region
          _
        $region36: #{tpu_custom_call.1} parent=11 // pred_fallthru
          _
      $region12: #{tpu_custom_call.1} parent=5 // pred_fallthru
        _
      %p341 = scmp.lt.s32.totalorder %s28, 2
      // Predicated region
      $region37: #{tpu_custom_call.1} parent=5 // pred_check
        %p342 = pneg %p341
      $region38: #{tpu_custom_call.1} parent=5 // pred_check_branch
        %344 = sbr.rel (%p342) target = $region40
      $region39: #{tpu_custom_call.1} parent=5 // pred_region
        // Predicated region
        $region41: #{tpu_custom_call.1} parent=39 // pred_check
          %p345 = pneg %p48
        $region42: #{tpu_custom_call.1} parent=39 // pred_check_branch
          %347 = sbr.rel (%p345) target = $region44
        $region43: #{tpu_custom_call.1} parent=39 // pred_region
          %s348 = sand.u32 %s28, 1
          %s349 = scalar_lea.sflag [#allocation3], %s348
          %s350 = sand.u32 %s38, 1
          %s351 = smul.addr %s350, 16
          %s352 = scalar_lea.vmem [#allocation2], %s351
          %s353 = smul.u32 2, %s28
          %s355 = ssub.s32 256, 256
          %356 = vsyncadd %s349, %s355
          %s357 = smul.addr %s353, 2
          %s358 = smul.addr %s357, 64
          %s359 = scalar_lea.hbm %s0, %s358
          %s360 = sshll.u32 %s352, 4
          %s361 = int_to_ptr.vmem [resolvable:$true] %s360
          %366 = dma.hbm_to_vmem [thread:$0]  %s359, 256, %s361, %s349, 128, 128, 8
        $region44: #{tpu_custom_call.1} parent=39 // pred_fallthru
          _
        // Predicated region
        $region45: #{tpu_custom_call.1} parent=39 // pred_check
          %p367 = pneg %p200
        $region46: #{tpu_custom_call.1} parent=39 // pred_check_branch
          %369 = sbr.rel (%p367) target = $region48
        $region47: #{tpu_custom_call.1} parent=39 // pred_region
          %s370 = sand.u32 %s28, 1
          %s371 = scalar_lea.sflag [#allocation3], %s370
          %s372 = sand.u32 %s190, 1
          %s373 = smul.addr %s372, 8
          %s374 = scalar_lea.vmem [#allocation13], %s373
          %s375 = smul.u32 2, %s28
          %s377 = ssub.s32 128, 128
          %378 = vsyncadd %s371, %s377
          %s379 = smul.addr %s375, 64
          %s380 = scalar_lea.hbm %s7, %s379
          %s381 = sshll.u32 %s374, 4
          %s382 = int_to_ptr.vmem [resolvable:$true] %s381
          %387 = dma.hbm_to_vmem [thread:$0]  %s380, 128, %s382, %s371, 64, 64, 4
        $region48: #{tpu_custom_call.1} parent=39 // pred_fallthru
          _
      $region40: #{tpu_custom_call.1} parent=5 // pred_fallthru
        _
      %p388 = scmp.le.s32.totalorder 1, %s28
      %p389 = scmp.lt.s32.totalorder %s28, 3
      %p390 = pnand %p388, %p389
      %p391 = pneg %p390
      // Predicated region
      $region49: #{tpu_custom_call.1} parent=5 // pred_check
        _
      $region50: #{tpu_custom_call.1} parent=5 // pred_check_branch
        %393 = sbr.rel (%p390) target = $region52
      $region51: #{tpu_custom_call.1} parent=5 // pred_region
        %s394 = ssub.s32 %s28, 1
        %s395 = sand.u32 %s33, 1
        %s396 = scalar_lea.sflag [#allocation3], %s395
        %s397 = sand.u32 %s41, 1
        %s398 = smul.addr %s397, 16
        %s399 = scalar_lea.vmem [#allocation2], %s398
        // Predicated region
        $region53: #{tpu_custom_call.1} parent=51 // pred_check
          %p400 = pneg %p54
        $region54: #{tpu_custom_call.1} parent=51 // pred_check_branch
          %402 = sbr.rel (%p400) target = $region56
        $region55: #{tpu_custom_call.1} parent=51 // pred_region
          %403 = dma.done %s396, 256
        $region56: #{tpu_custom_call.1} parent=51 // pred_fallthru
          _
        // Predicated region
        $region57: #{tpu_custom_call.1} parent=51 // pred_check
          %p404 = pneg %p75
        $region58: #{tpu_custom_call.1} parent=51 // pred_check_branch
          %406 = sbr.rel (%p404) target = $region60
        $region59: #{tpu_custom_call.1} parent=51 // pred_region
          %407 = dma.done [#allocation6], 2048
        $region60: #{tpu_custom_call.1} parent=51 // pred_fallthru
          _
        // Predicated region
        $region61: #{tpu_custom_call.1} parent=51 // pred_check
          %p408 = pneg %p96
        $region62: #{tpu_custom_call.1} parent=51 // pred_check_branch
          %410 = sbr.rel (%p408) target = $region64
        $region63: #{tpu_custom_call.1} parent=51 // pred_region
          %411 = dma.done [#allocation6], 1024
        $region64: #{tpu_custom_call.1} parent=51 // pred_fallthru
          _
        // Predicated region
        $region65: #{tpu_custom_call.1} parent=51 // pred_check
          %p412 = pneg %p117
        $region66: #{tpu_custom_call.1} parent=51 // pred_check_branch
          %414 = sbr.rel (%p412) target = $region68
        $region67: #{tpu_custom_call.1} parent=51 // pred_region
          %415 = dma.done [#allocation9], 1024
        $region68: #{tpu_custom_call.1} parent=51 // pred_fallthru
          _
        // Predicated region
        $region69: #{tpu_custom_call.1} parent=51 // pred_check
          %p416 = pneg %p138
        $region70: #{tpu_custom_call.1} parent=51 // pred_check_branch
          %418 = sbr.rel (%p416) target = $region72
        $region71: #{tpu_custom_call.1} parent=51 // pred_region
          %419 = dma.done [#allocation9], 1024
        $region72: #{tpu_custom_call.1} parent=51 // pred_fallthru
          _
        // Predicated region
        $region73: #{tpu_custom_call.1} parent=51 // pred_check
          %p420 = pneg %p159
        $region74: #{tpu_custom_call.1} parent=51 // pred_check_branch
          %422 = sbr.rel (%p420) target = $region76
        $region75: #{tpu_custom_call.1} parent=51 // pred_region
          %423 = dma.done [#allocation12], 2048
        $region76: #{tpu_custom_call.1} parent=51 // pred_fallthru
          _
        %s424 = sand.u32 %s33, 1
        %s425 = scalar_lea.sflag [#allocation3], %s424
        %s426 = sand.u32 %s193, 1
        %s427 = smul.addr %s426, 8
        %s428 = scalar_lea.vmem [#allocation13], %s427
        // Predicated region
        $region77: #{tpu_custom_call.1} parent=51 // pred_check
          %p429 = pneg %p206
        $region78: #{tpu_custom_call.1} parent=51 // pred_check_branch
          %431 = sbr.rel (%p429) target = $region80
        $region79: #{tpu_custom_call.1} parent=51 // pred_region
          %432 = dma.done %s425, 128
        $region80: #{tpu_custom_call.1} parent=51 // pred_fallthru
          _
        %s433 = sand.u32 %s33, 1
        %s434 = scalar_lea.sflag [#allocation3], %s433
        %s435 = sand.u32 %s41, 1
        %s436 = smul.addr %s435, 16
        %s437 = scalar_lea.vmem [#allocation2], %s436
        %p438 = pneg %p54
        %p439 = pneg %p51
        %p440 = pneg %p75
        %p441 = pneg %p72
        %p442 = pneg %p96
        %p443 = pneg %p93
        %p444 = pneg %p117
        %p445 = pneg %p114
        %p446 = pneg %p138
        %p447 = pneg %p135
        %p448 = pneg %p159
        %p449 = pneg %p156
        %p450 = pneg %p180
        %p451 = pneg %p177
        %s452 = sand.u32 %s33, 1
        %s453 = scalar_lea.sflag [#allocation3], %s452
        %s454 = sand.u32 %s193, 1
        %s455 = smul.addr %s454, 8
        %s456 = scalar_lea.vmem [#allocation13], %s455
        %p457 = pneg %p206
        %p458 = pneg %p203
        %p459 = pneg %p232
        %p460 = pneg %p229
        %s461 = sand.u32 %s219, 1
        %s462 = scalar_lea.sflag [#allocation4], %s461
        %s463 = sand.u32 %s219, 1
        %s464 = smul.addr %s463, 16
        %s465 = scalar_lea.vmem [#allocation14], %s464
        %p466 = pneg %p258
        %p467 = pneg %p255
        %s468 = sand.u32 %s245, 1
        %s469 = scalar_lea.sflag [#allocation16], %s468
        %s470 = sand.u32 %s245, 1
        %s471 = smul.addr %s470, 8
        %s472 = scalar_lea.vmem [#allocation15], %s471
        %s473 = smul.u32 2, %s33
        %s474 = smul.u32 2, %s33
        %s475 = smul.u32 2, %s33
        %s476 = smul.u32 2, %s33
        %v478 = vld [vmem:[%s6] ss:$0 sm:$0xff]
        %v479 = vld [vmem:[%s6 + $0x1] ss:$0 sm:$0xff]
        %v480 = vld [vmem:[%s6 + $0x2] ss:$0 sm:$0xff]
        %v481 = vld [vmem:[%s6 + $0x3] ss:$0 sm:$0xff]
        %s482 = scalar_lea.vmem %s6, 4
        %v483 = vld [vmem:[%s482] ss:$8 sm:$0x3]
        %v484 = vld [vmem:[%s6 + $0x5] ss:$0 sm:$0xff]
        %v485 = vld [vmem:[%s6 + $0x6] ss:$0 sm:$0xff]
        %v486 = vld [vmem:[%s399] sm:$0xff]
        %v487 = vld [vmem:[%s399 + $0x8] sm:$0xff]
        %v488 = vld [vmem:[#allocation5] sm:$0xf]
        %v489 = vld [vmem:[#allocation5 + $0x4] sm:$0xf]
        %v490 = vld [vmem:[#allocation5 + $0x8] sm:$0xf]
        %v491 = vld [vmem:[#allocation5 + $0xc] sm:$0xf]
        %v492 = vld [vmem:[#allocation5 + $0x10] sm:$0xf]
        %v493 = vld [vmem:[#allocation5 + $0x14] sm:$0xf]
        %v494 = vld [vmem:[#allocation5 + $0x18] sm:$0xf]
        %v495 = vld [vmem:[#allocation5 + $0x1c] sm:$0xf]
        %v496 = vld [vmem:[#allocation5 + $0x20] sm:$0xf]
        %v497 = vld [vmem:[#allocation5 + $0x24] sm:$0xf]
        %v498 = vld [vmem:[#allocation5 + $0x28] sm:$0xf]
        %v499 = vld [vmem:[#allocation5 + $0x2c] sm:$0xf]
        %v500 = vld [vmem:[#allocation5 + $0x30] sm:$0xf]
        %v501 = vld [vmem:[#allocation5 + $0x34] sm:$0xf]
        %v502 = vld [vmem:[#allocation5 + $0x38] sm:$0xf]
        %v503 = vld [vmem:[#allocation5 + $0x3c] sm:$0xf]
        %v504 = vld [vmem:[#allocation5 + $0x40] sm:$0xf]
        %v505 = vld [vmem:[#allocation5 + $0x44] sm:$0xf]
        %v506 = vld [vmem:[#allocation5 + $0x48] sm:$0xf]
        %v507 = vld [vmem:[#allocation5 + $0x4c] sm:$0xf]
        %v508 = vld [vmem:[#allocation5 + $0x50] sm:$0xf]
        %v509 = vld [vmem:[#allocation5 + $0x54] sm:$0xf]
        %v510 = vld [vmem:[#allocation5 + $0x58] sm:$0xf]
        %v511 = vld [vmem:[#allocation5 + $0x5c] sm:$0xf]
        %v512 = vld [vmem:[#allocation5 + $0x60] sm:$0xf]
        %v513 = vld [vmem:[#allocation5 + $0x64] sm:$0xf]
        %v514 = vld [vmem:[#allocation5 + $0x68] sm:$0xf]
        %v515 = vld [vmem:[#allocation5 + $0x6c] sm:$0xf]
        %v516 = vld [vmem:[#allocation5 + $0x70] sm:$0xf]
        %v517 = vld [vmem:[#allocation5 + $0x74] sm:$0xf]
        %v518 = vld [vmem:[#allocation5 + $0x78] sm:$0xf]
        %v519 = vld [vmem:[#allocation5 + $0x7c] sm:$0xf]
        %v522 = vunpack.c.l.b16 %v486
        %v523 = vunpack.c.h.b16 %v486
        %v524 = vunpack.c.l.b16 %v487
        %v525 = vunpack.c.h.b16 %v487
        %v526 = vpack.c.b16 %v524, %v522
        %v527 = vpack.c.b16 %v525, %v523
        %v562 = vunpack.c.l.b16 %v488
        %v563 = vunpack.c.l.b16 %v489
        %v564 = vunpack.c.l.b16 %v490
        %v565 = vunpack.c.l.b16 %v491
        %v566 = vunpack.c.l.b16 %v492
        %v567 = vunpack.c.l.b16 %v493
        %v568 = vunpack.c.l.b16 %v494
        %v569 = vunpack.c.l.b16 %v495
        %v570 = vunpack.c.l.b16 %v496
        %v571 = vunpack.c.l.b16 %v497
        %v572 = vunpack.c.l.b16 %v498
        %v573 = vunpack.c.l.b16 %v499
        %v574 = vunpack.c.l.b16 %v500
        %v575 = vunpack.c.l.b16 %v501
        %v576 = vunpack.c.l.b16 %v502
        %v577 = vunpack.c.l.b16 %v503
        %v578 = vunpack.c.l.b16 %v504
        %v579 = vunpack.c.l.b16 %v505
        %v580 = vunpack.c.l.b16 %v506
        %v581 = vunpack.c.l.b16 %v507
        %v582 = vunpack.c.l.b16 %v508
        %v583 = vunpack.c.l.b16 %v509
        %v584 = vunpack.c.l.b16 %v510
        %v585 = vunpack.c.l.b16 %v511
        %v586 = vunpack.c.l.b16 %v512
        %v587 = vunpack.c.l.b16 %v513
        %v588 = vunpack.c.l.b16 %v514
        %v589 = vunpack.c.l.b16 %v515
        %v590 = vunpack.c.l.b16 %v516
        %v591 = vunpack.c.l.b16 %v517
        %v592 = vunpack.c.l.b16 %v518
        %v593 = vunpack.c.l.b16 %v519
        %v594 = vpack.c.b16 %v563, %v562
        %v595 = vpack.c.b16 %v565, %v564
        %v596 = vpack.c.b16 %v567, %v566
        %v597 = vpack.c.b16 %v569, %v568
        %v598 = vpack.c.b16 %v571, %v570
        %v599 = vpack.c.b16 %v573, %v572
        %v600 = vpack.c.b16 %v575, %v574
        %v601 = vpack.c.b16 %v577, %v576
        %v602 = vpack.c.b16 %v579, %v578
        %v603 = vpack.c.b16 %v581, %v580
        %v604 = vpack.c.b16 %v583, %v582
        %v605 = vpack.c.b16 %v585, %v584
        %v606 = vpack.c.b16 %v587, %v586
        %v607 = vpack.c.b16 %v589, %v588
        %v608 = vpack.c.b16 %v591, %v590
        %v609 = vpack.c.b16 %v593, %v592
        %626 = vmatprep.subr.bf16.mxu0 0
        %627 = vmatpush1.bf16.msra.mxu0 %v594
        %628 = vmatprep.subr.bf16.mxu0 0
        %629 = vmatpush1.bf16.msra.mxu0 %v595
        %630 = vmatprep.subr.bf16.mxu0 0
        %631 = vmatpush1.bf16.msra.mxu0 %v596
        %632 = vmatprep.subr.bf16.mxu0 0
        %633 = vmatpush1.bf16.msra.mxu0 %v597
        %634 = vmatprep.subr.bf16.mxu0 0
        %635 = vmatpush1.bf16.msra.mxu0 %v598
        %636 = vmatprep.subr.bf16.mxu0 0
        %637 = vmatpush1.bf16.msra.mxu0 %v599
        %638 = vmatprep.subr.bf16.mxu0 0
        %639 = vmatpush1.bf16.msra.mxu0 %v600
        %640 = vmatprep.subr.bf16.mxu0 0
        %641 = vmatpush1.bf16.msra.mxu0 %v601
        %642 = vmatprep.subr.bf16.mxu0 0
        %643 = vmatpush1.bf16.msra.mxu0 %v602
        %644 = vmatprep.subr.bf16.mxu0 0
        %645 = vmatpush1.bf16.msra.mxu0 %v603
        %646 = vmatprep.subr.bf16.mxu0 0
        %647 = vmatpush1.bf16.msra.mxu0 %v604
        %648 = vmatprep.subr.bf16.mxu0 0
        %649 = vmatpush1.bf16.msra.mxu0 %v605
        %650 = vmatprep.subr.bf16.mxu0 0
        %651 = vmatpush1.bf16.msra.mxu0 %v606
        %652 = vmatprep.subr.bf16.mxu0 0
        %653 = vmatpush1.bf16.msra.mxu0 %v607
        %654 = vmatprep.subr.bf16.mxu0 0
        %655 = vmatpush1.bf16.msra.mxu0 %v608
        %656 = vmatprep.subr.bf16.mxu0 0
        %657 = vmatpush1.bf16.msra.mxu0 %v609
        %658 = vmatprep.mubr.bf16.mxu0 %v527
        %659 = vmatmul.mubr.bf16.gmra.mrb[0].mxu0 %v526
        %v660 = vpop.f32.mrb[0].mxu0
        %v661 = vadd.f32 %v478, %v660
        %v662 = vpop.f32.mrb[0].mxu0
        %v663 = vpop.f32.mrb[0].mxu0
        %v664 = vadd.f32 %v478, %v663
        %v665 = vpop.f32.mrb[0].mxu0
        %666 = vdwg.mxu0
        %v667 = vxor.u32 %v661, 2147483648
        %v668 = vxor.u32 %v664, 2147483648
        %v669 = vmul.f32 %v667, 1.442695
        %v670 = vpow.pop %v669
        %v671 = vmul.f32 %v668, 1.442695
        %v672 = vpow.pop %v671
        %v673 = vadd.f32 %v670, 1.0
        %v674 = vadd.f32 %v672, 1.0
        %v675 = vrcp.pop %v673
        %v676 = vmul.f32 1.0, %v675
        %v677 = vrcp.pop %v674
        %v678 = vmul.f32 1.0, %v677
        %v679 = vpack.c.bf16 %v678, %v676
        %v680 = vld [vmem:[#allocation7] sm:$0xf]
        %v681 = vld [vmem:[#allocation7 + $0x4] sm:$0xf]
        %v682 = vld [vmem:[#allocation7 + $0x8] sm:$0xf]
        %v683 = vld [vmem:[#allocation7 + $0xc] sm:$0xf]
        %v684 = vld [vmem:[#allocation7 + $0x10] sm:$0xf]
        %v685 = vld [vmem:[#allocation7 + $0x14] sm:$0xf]
        %v686 = vld [vmem:[#allocation7 + $0x18] sm:$0xf]
        %v687 = vld [vmem:[#allocation7 + $0x1c] sm:$0xf]
        %v688 = vld [vmem:[#allocation7 + $0x20] sm:$0xf]
        %v689 = vld [vmem:[#allocation7 + $0x24] sm:$0xf]
        %v690 = vld [vmem:[#allocation7 + $0x28] sm:$0xf]
        %v691 = vld [vmem:[#allocation7 + $0x2c] sm:$0xf]
        %v692 = vld [vmem:[#allocation7 + $0x30] sm:$0xf]
        %v693 = vld [vmem:[#allocation7 + $0x34] sm:$0xf]
        %v694 = vld [vmem:[#allocation7 + $0x38] sm:$0xf]
        %v695 = vld [vmem:[#allocation7 + $0x3c] sm:$0xf]
        %v712 = vunpack.c.l.b16 %v680
        %v713 = vunpack.c.l.b16 %v681
        %v714 = vunpack.c.l.b16 %v682
        %v715 = vunpack.c.l.b16 %v683
        %v716 = vunpack.c.l.b16 %v684
        %v717 = vunpack.c.l.b16 %v685
        %v718 = vunpack.c.l.b16 %v686
        %v719 = vunpack.c.l.b16 %v687
        %v720 = vunpack.c.l.b16 %v688
        %v721 = vunpack.c.l.b16 %v689
        %v722 = vunpack.c.l.b16 %v690
        %v723 = vunpack.c.l.b16 %v691
        %v724 = vunpack.c.l.b16 %v692
        %v725 = vunpack.c.l.b16 %v693
        %v726 = vunpack.c.l.b16 %v694
        %v727 = vunpack.c.l.b16 %v695
        %v728 = vpack.c.b16 %v713, %v712
        %v729 = vpack.c.b16 %v715, %v714
        %v730 = vpack.c.b16 %v717, %v716
        %v731 = vpack.c.b16 %v719, %v718
        %v732 = vpack.c.b16 %v721, %v720
        %v733 = vpack.c.b16 %v723, %v722
        %v734 = vpack.c.b16 %v725, %v724
        %v735 = vpack.c.b16 %v727, %v726
        %744 = vmatprep.subr.bf16.mxu0 0
        %745 = vmatpush1.bf16.msra.mxu0 %v728
        %746 = vmatprep.subr.bf16.mxu0 0
        %747 = vmatpush1.bf16.msra.mxu0 %v729
        %748 = vmatprep.subr.bf16.mxu0 0
        %749 = vmatpush1.bf16.msra.mxu0 %v730
        %750 = vmatprep.subr.bf16.mxu0 0
        %751 = vmatpush1.bf16.msra.mxu0 %v731
        %752 = vmatprep.subr.bf16.mxu0 0
        %753 = vmatpush1.bf16.msra.mxu0 %v732
        %754 = vmatprep.subr.bf16.mxu0 0
        %755 = vmatpush1.bf16.msra.mxu0 %v733
        %756 = vmatprep.subr.bf16.mxu0 0
        %757 = vmatpush1.bf16.msra.mxu0 %v734
        %758 = vmatprep.subr.bf16.mxu0 0
        %759 = vmatpush1.bf16.msra.mxu0 %v735
        %760 = vmatprep.subr.bf16.mxu0 0
        %761 = vmatpush1.bf16.msra.mxu0 0
        %762 = vmatprep.subr.bf16.mxu0 0
        %763 = vmatpush1.bf16.msra.mxu0 0
        %764 = vmatprep.subr.bf16.mxu0 0
        %765 = vmatpush1.bf16.msra.mxu0 0
        %766 = vmatprep.subr.bf16.mxu0 0
        %767 = vmatpush1.bf16.msra.mxu0 0
        %768 = vmatprep.subr.bf16.mxu0 0
        %769 = vmatpush1.bf16.msra.mxu0 0
        %770 = vmatprep.subr.bf16.mxu0 0
        %771 = vmatpush1.bf16.msra.mxu0 0
        %772 = vmatprep.subr.bf16.mxu0 0
        %773 = vmatpush1.bf16.msra.mxu0 0
        %774 = vmatprep.subr.bf16.mxu0 0
        %775 = vmatpush1.bf16.msra.mxu0 0
        %776 = vmatprep.mubr.bf16.mxu0 0
        %777 = vmatmul.mubr.bf16.gmra.mrb[0].mxu0 %v679
        %v778 = vpop.f32.mrb[0].mxu0
        %v779 = vadd.f32 %v479, %v778
        %v780 = vpop.f32.mrb[0].mxu0
        %v781 = vpop.f32.mrb[0].mxu0
        %v782 = vadd.f32 %v479, %v781
        %v783 = vpop.f32.mrb[0].mxu0
        %784 = vdwg.mxu0
        %v785 = vmul.f32 %v779, %v484
        %v786 = vmul.f32 %v782, %v484
        %v787 = vmul.f32 %v779, %v485
        %v788 = vmul.f32 %v782, %v485
        %v789 = vmul.f32 %v787, 0.5
        %v790 = vmul.f32 %v788, 0.5
        %v791 = vmul.f32 %v789, 1.442695
        %v792 = vpow.pop %v791
        %v793 = vmul.f32 %v790, 1.442695
        %v794 = vpow.pop %v793
        %v795 = vmul.f32 %v792, %v485
        %v796 = vmul.f32 %v794, %v485
        %v797 = vadd.f32 %v785, %v795
        %v798 = vadd.f32 %v786, %v796
        %v799 = vpack.c.bf16 %v798, %v797
        %v801 = vunpack.c.l.b16 %v799
        %v802 = vunpack.c.h.b16 %v799
        %v803 = vpack.c.b16 %v801, %v801
        %v804 = vpack.c.b16 %v802, %v802
        %807 = vst [vmem:[%s472] sm:$0xf] %v803
        %808 = vst [vmem:[%s472 + $0x4] sm:$0xf] %v804
        %v809 = vld [vmem:[%s428] sm:$0xf]
        %v810 = vld [vmem:[%s428 + $0x4] sm:$0xf]
        %v811 = vunpack.c.l.bf16 %v809
        %v812 = vunpack.c.l.bf16 %v810
        %v813 = vmul.f32 %v792, %v811
        %v814 = vmul.f32 %v794, %v812
        %v815 = vadd.f32 %v785, %v813
        %v816 = vadd.f32 %v786, %v814
        %v817 = vpack.c.bf16 %v816, %v815
        %v818 = vld [vmem:[#allocation8] sm:$0xf]
        %v819 = vld [vmem:[#allocation8 + $0x4] sm:$0xf]
        %v820 = vld [vmem:[#allocation8 + $0x8] sm:$0xf]
        %v821 = vld [vmem:[#allocation8 + $0xc] sm:$0xf]
        %v822 = vld [vmem:[#allocation8 + $0x10] sm:$0xf]
        %v823 = vld [vmem:[#allocation8 + $0x14] sm:$0xf]
        %v824 = vld [vmem:[#allocation8 + $0x18] sm:$0xf]
        %v825 = vld [vmem:[#allocation8 + $0x1c] sm:$0xf]
        %v826 = vld [vmem:[#allocation8 + $0x20] sm:$0xf]
        %v827 = vld [vmem:[#allocation8 + $0x24] sm:$0xf]
        %v828 = vld [vmem:[#allocation8 + $0x28] sm:$0xf]
        %v829 = vld [vmem:[#allocation8 + $0x2c] sm:$0xf]
        %v830 = vld [vmem:[#allocation8 + $0x30] sm:$0xf]
        %v831 = vld [vmem:[#allocation8 + $0x34] sm:$0xf]
        %v832 = vld [vmem:[#allocation8 + $0x38] sm:$0xf]
        %v833 = vld [vmem:[#allocation8 + $0x3c] sm:$0xf]
        %v850 = vunpack.c.l.b16 %v818
        %v851 = vunpack.c.l.b16 %v819
        %v852 = vunpack.c.l.b16 %v820
        %v853 = vunpack.c.l.b16 %v821
        %v854 = vunpack.c.l.b16 %v822
        %v855 = vunpack.c.l.b16 %v823
        %v856 = vunpack.c.l.b16 %v824
        %v857 = vunpack.c.l.b16 %v825
        %v858 = vunpack.c.l.b16 %v826
        %v859 = vunpack.c.l.b16 %v827
        %v860 = vunpack.c.l.b16 %v828
        %v861 = vunpack.c.l.b16 %v829
        %v862 = vunpack.c.l.b16 %v830
        %v863 = vunpack.c.l.b16 %v831
        %v864 = vunpack.c.l.b16 %v832
        %v865 = vunpack.c.l.b16 %v833
        %v866 = vpack.c.b16 %v851, %v850
        %v867 = vpack.c.b16 %v853, %v852
        %v868 = vpack.c.b16 %v855, %v854
        %v869 = vpack.c.b16 %v857, %v856
        %v870 = vpack.c.b16 %v859, %v858
        %v871 = vpack.c.b16 %v861, %v860
        %v872 = vpack.c.b16 %v863, %v862
        %v873 = vpack.c.b16 %v865, %v864
        %882 = vmatprep.subr.bf16.mxu0 0
        %883 = vmatpush1.bf16.msra.mxu0 %v866
        %884 = vmatprep.subr.bf16.mxu0 0
        %885 = vmatpush1.bf16.msra.mxu0 %v867
        %886 = vmatprep.subr.bf16.mxu0 0
        %887 = vmatpush1.bf16.msra.mxu0 %v868
        %888 = vmatprep.subr.bf16.mxu0 0
        %889 = vmatpush1.bf16.msra.mxu0 %v869
        %890 = vmatprep.subr.bf16.mxu0 0
        %891 = vmatpush1.bf16.msra.mxu0 %v870
        %892 = vmatprep.subr.bf16.mxu0 0
        %893 = vmatpush1.bf16.msra.mxu0 %v871
        %894 = vmatprep.subr.bf16.mxu0 0
        %895 = vmatpush1.bf16.msra.mxu0 %v872
        %896 = vmatprep.subr.bf16.mxu0 0
        %897 = vmatpush1.bf16.msra.mxu0 %v873
        %898 = vmatprep.subr.bf16.mxu0 0
        %899 = vmatpush1.bf16.msra.mxu0 0
        %900 = vmatprep.subr.bf16.mxu0 0
        %901 = vmatpush1.bf16.msra.mxu0 0
        %902 = vmatprep.subr.bf16.mxu0 0
        %903 = vmatpush1.bf16.msra.mxu0 0
        %904 = vmatprep.subr.bf16.mxu0 0
        %905 = vmatpush1.bf16.msra.mxu0 0
        %906 = vmatprep.subr.bf16.mxu0 0
        %907 = vmatpush1.bf16.msra.mxu0 0
        %908 = vmatprep.subr.bf16.mxu0 0
        %909 = vmatpush1.bf16.msra.mxu0 0
        %910 = vmatprep.subr.bf16.mxu0 0
        %911 = vmatpush1.bf16.msra.mxu0 0
        %912 = vmatprep.subr.bf16.mxu0 0
        %913 = vmatpush1.bf16.msra.mxu0 0
        %914 = vmatprep.mubr.bf16.mxu0 0
        %915 = vmatmul.mubr.bf16.gmra.mrb[0].mxu0 %v817
        %v916 = vpop.f32.mrb[0].mxu0
        %v917 = vadd.f32 %v480, %v916
        %v918 = vpop.f32.mrb[0].mxu0
        %v919 = vpop.f32.mrb[0].mxu0
        %v920 = vadd.f32 %v480, %v919
        %v921 = vpop.f32.mrb[0].mxu0
        %922 = vdwg.mxu0
        %v923 = vmax.f32 %v917, 0.0
        %v924 = vmax.f32 %v920, 0.0
        %v925 = vpack.c.bf16 %v924, %v923
        %v926 = vld [vmem:[#allocation10] sm:$0xf]
        %v927 = vld [vmem:[#allocation10 + $0x4] sm:$0xf]
        %v928 = vld [vmem:[#allocation10 + $0x8] sm:$0xf]
        %v929 = vld [vmem:[#allocation10 + $0xc] sm:$0xf]
        %v930 = vld [vmem:[#allocation10 + $0x10] sm:$0xf]
        %v931 = vld [vmem:[#allocation10 + $0x14] sm:$0xf]
        %v932 = vld [vmem:[#allocation10 + $0x18] sm:$0xf]
        %v933 = vld [vmem:[#allocation10 + $0x1c] sm:$0xf]
        %v934 = vld [vmem:[#allocation10 + $0x20] sm:$0xf]
        %v935 = vld [vmem:[#allocation10 + $0x24] sm:$0xf]
        %v936 = vld [vmem:[#allocation10 + $0x28] sm:$0xf]
        %v937 = vld [vmem:[#allocation10 + $0x2c] sm:$0xf]
        %v938 = vld [vmem:[#allocation10 + $0x30] sm:$0xf]
        %v939 = vld [vmem:[#allocation10 + $0x34] sm:$0xf]
        %v940 = vld [vmem:[#allocation10 + $0x38] sm:$0xf]
        %v941 = vld [vmem:[#allocation10 + $0x3c] sm:$0xf]
        %v958 = vunpack.c.l.b16 %v926
        %v959 = vunpack.c.l.b16 %v927
        %v960 = vunpack.c.l.b16 %v928
        %v961 = vunpack.c.l.b16 %v929
        %v962 = vunpack.c.l.b16 %v930
        %v963 = vunpack.c.l.b16 %v931
        %v964 = vunpack.c.l.b16 %v932
        %v965 = vunpack.c.l.b16 %v933
        %v966 = vunpack.c.l.b16 %v934
        %v967 = vunpack.c.l.b16 %v935
        %v968 = vunpack.c.l.b16 %v936
        %v969 = vunpack.c.l.b16 %v937
        %v970 = vunpack.c.l.b16 %v938
        %v971 = vunpack.c.l.b16 %v939
        %v972 = vunpack.c.l.b16 %v940
        %v973 = vunpack.c.l.b16 %v941
        %v974 = vpack.c.b16 %v959, %v958
        %v975 = vpack.c.b16 %v961, %v960
        %v976 = vpack.c.b16 %v963, %v962
        %v977 = vpack.c.b16 %v965, %v964
        %v978 = vpack.c.b16 %v967, %v966
        %v979 = vpack.c.b16 %v969, %v968
        %v980 = vpack.c.b16 %v971, %v970
        %v981 = vpack.c.b16 %v973, %v972
        %990 = vmatprep.subr.bf16.mxu0 0
        %991 = vmatpush1.bf16.msra.mxu0 %v974
        %992 = vmatprep.subr.bf16.mxu0 0
        %993 = vmatpush1.bf16.msra.mxu0 %v975
        %994 = vmatprep.subr.bf16.mxu0 0
        %995 = vmatpush1.bf16.msra.mxu0 %v976
        %996 = vmatprep.subr.bf16.mxu0 0
        %997 = vmatpush1.bf16.msra.mxu0 %v977
        %998 = vmatprep.subr.bf16.mxu0 0
        %999 = vmatpush1.bf16.msra.mxu0 %v978
        %1000 = vmatprep.subr.bf16.mxu0 0
        %1001 = vmatpush1.bf16.msra.mxu0 %v979
        %1002 = vmatprep.subr.bf16.mxu0 0
        %1003 = vmatpush1.bf16.msra.mxu0 %v980
        %1004 = vmatprep.subr.bf16.mxu0 0
        %1005 = vmatpush1.bf16.msra.mxu0 %v981
        %1006 = vmatprep.subr.bf16.mxu0 0
        %1007 = vmatpush1.bf16.msra.mxu0 0
        %1008 = vmatprep.subr.bf16.mxu0 0
        %1009 = vmatpush1.bf16.msra.mxu0 0
        %1010 = vmatprep.subr.bf16.mxu0 0
        %1011 = vmatpush1.bf16.msra.mxu0 0
        %1012 = vmatprep.subr.bf16.mxu0 0
        %1013 = vmatpush1.bf16.msra.mxu0 0
        %1014 = vmatprep.subr.bf16.mxu0 0
        %1015 = vmatpush1.bf16.msra.mxu0 0
        %1016 = vmatprep.subr.bf16.mxu0 0
        %1017 = vmatpush1.bf16.msra.mxu0 0
        %1018 = vmatprep.subr.bf16.mxu0 0
        %1019 = vmatpush1.bf16.msra.mxu0 0
        %1020 = vmatprep.subr.bf16.mxu0 0
        %1021 = vmatpush1.bf16.msra.mxu0 0
        %1022 = vmatprep.mubr.bf16.mxu0 0
        %1023 = vmatmul.mubr.bf16.gmra.mrb[0].mxu0 %v925
        %v1024 = vpop.f32.mrb[0].mxu0
        %v1025 = vadd.f32 %v481, %v1024
        %v1026 = vpop.f32.mrb[0].mxu0
        %v1027 = vpop.f32.mrb[0].mxu0
        %v1028 = vadd.f32 %v481, %v1027
        %v1029 = vpop.f32.mrb[0].mxu0
        %1030 = vdwg.mxu0
        %v1031 = vmax.f32 %v1025, 0.0
        %v1032 = vmax.f32 %v1028, 0.0
        %v1033 = vpack.c.bf16 %v1032, %v1031
        %v1034 = vld [vmem:[#allocation11] sm:$0xff]
        %v1035 = vld [vmem:[#allocation11 + $0x8] sm:$0xff]
        %v1036 = vld [vmem:[#allocation11 + $0x10] sm:$0xff]
        %v1037 = vld [vmem:[#allocation11 + $0x18] sm:$0xff]
        %v1038 = vld [vmem:[#allocation11 + $0x20] sm:$0xff]
        %v1039 = vld [vmem:[#allocation11 + $0x28] sm:$0xff]
        %v1040 = vld [vmem:[#allocation11 + $0x30] sm:$0xff]
        %v1041 = vld [vmem:[#allocation11 + $0x38] sm:$0xff]
        %v1042 = vld [vmem:[#allocation11 + $0x40] sm:$0xff]
        %v1043 = vld [vmem:[#allocation11 + $0x48] sm:$0xff]
        %v1044 = vld [vmem:[#allocation11 + $0x50] sm:$0xff]
        %v1045 = vld [vmem:[#allocation11 + $0x58] sm:$0xff]
        %v1046 = vld [vmem:[#allocation11 + $0x60] sm:$0xff]
        %v1047 = vld [vmem:[#allocation11 + $0x68] sm:$0xff]
        %v1048 = vld [vmem:[#allocation11 + $0x70] sm:$0xff]
        %v1049 = vld [vmem:[#allocation11 + $0x78] sm:$0xff]
        %v1051 = vlaneseq
        %v1052 = vshrl.u32 %v1051, 7
        %v1053 = vsub.s32 0, %v1052
        %v1054 = vrot.slane %v483, %v1053
        %v1055 = vlaneseq
        %v1056 = vshrl.u32 %v1055, 7
        %v1057 = vsub.s32 1, %v1056
        %v1058 = vrot.slane %v483, %v1057
        %v1077 = vunpack.c.l.b16 %v1034
        %v1078 = vunpack.c.h.b16 %v1034
        %v1079 = vunpack.c.l.b16 %v1035
        %v1080 = vunpack.c.h.b16 %v1035
        %v1081 = vunpack.c.l.b16 %v1036
        %v1082 = vunpack.c.h.b16 %v1036
        %v1083 = vunpack.c.l.b16 %v1037
        %v1084 = vunpack.c.h.b16 %v1037
        %v1085 = vunpack.c.l.b16 %v1038
        %v1086 = vunpack.c.h.b16 %v1038
        %v1087 = vunpack.c.l.b16 %v1039
        %v1088 = vunpack.c.h.b16 %v1039
        %v1089 = vunpack.c.l.b16 %v1040
        %v1090 = vunpack.c.h.b16 %v1040
        %v1091 = vunpack.c.l.b16 %v1041
        %v1092 = vunpack.c.h.b16 %v1041
        %v1093 = vunpack.c.l.b16 %v1042
        %v1094 = vunpack.c.h.b16 %v1042
        %v1095 = vunpack.c.l.b16 %v1043
        %v1096 = vunpack.c.h.b16 %v1043
        %v1097 = vunpack.c.l.b16 %v1044
        %v1098 = vunpack.c.h.b16 %v1044
        %v1099 = vunpack.c.l.b16 %v1045
        %v1100 = vunpack.c.h.b16 %v1045
        %v1101 = vunpack.c.l.b16 %v1046
        %v1102 = vunpack.c.h.b16 %v1046
        %v1103 = vunpack.c.l.b16 %v1047
        %v1104 = vunpack.c.h.b16 %v1047
        %v1105 = vunpack.c.l.b16 %v1048
        %v1106 = vunpack.c.h.b16 %v1048
        %v1107 = vunpack.c.l.b16 %v1049
        %v1108 = vunpack.c.h.b16 %v1049
        %v1109 = vpack.c.b16 %v1079, %v1077
        %v1110 = vpack.c.b16 %v1080, %v1078
        %v1111 = vpack.c.b16 %v1083, %v1081
        %v1112 = vpack.c.b16 %v1084, %v1082
        %v1113 = vpack.c.b16 %v1087, %v1085
        %v1114 = vpack.c.b16 %v1088, %v1086
        %v1115 = vpack.c.b16 %v1091, %v1089
        %v1116 = vpack.c.b16 %v1092, %v1090
        %v1117 = vpack.c.b16 %v1095, %v1093
        %v1118 = vpack.c.b16 %v1096, %v1094
        %v1119 = vpack.c.b16 %v1099, %v1097
        %v1120 = vpack.c.b16 %v1100, %v1098
        %v1121 = vpack.c.b16 %v1103, %v1101
        %v1122 = vpack.c.b16 %v1104, %v1102
        %v1123 = vpack.c.b16 %v1107, %v1105
        %v1124 = vpack.c.b16 %v1108, %v1106
        %1141 = vmatprep.subr.bf16.mxu0 %v1110
        %1142 = vmatpush1.bf16.msra.mxu0 %v1109
        %1143 = vmatprep.subr.bf16.mxu0 %v1112
        %1144 = vmatpush1.bf16.msra.mxu0 %v1111
        %1145 = vmatprep.subr.bf16.mxu0 %v1114
        %1146 = vmatpush1.bf16.msra.mxu0 %v1113
        %1147 = vmatprep.subr.bf16.mxu0 %v1116
        %1148 = vmatpush1.bf16.msra.mxu0 %v1115
        %1149 = vmatprep.subr.bf16.mxu0 %v1118
        %1150 = vmatpush1.bf16.msra.mxu0 %v1117
        %1151 = vmatprep.subr.bf16.mxu0 %v1120
        %1152 = vmatpush1.bf16.msra.mxu0 %v1119
        %1153 = vmatprep.subr.bf16.mxu0 %v1122
        %1154 = vmatpush1.bf16.msra.mxu0 %v1121
        %1155 = vmatprep.subr.bf16.mxu0 %v1124
        %1156 = vmatpush1.bf16.msra.mxu0 %v1123
        %1157 = vmatprep.subr.bf16.mxu0 0
        %1158 = vmatpush1.bf16.msra.mxu0 0
        %1159 = vmatprep.subr.bf16.mxu0 0
        %1160 = vmatpush1.bf16.msra.mxu0 0
        %1161 = vmatprep.subr.bf16.mxu0 0
        %1162 = vmatpush1.bf16.msra.mxu0 0
        %1163 = vmatprep.subr.bf16.mxu0 0
        %1164 = vmatpush1.bf16.msra.mxu0 0
        %1165 = vmatprep.subr.bf16.mxu0 0
        %1166 = vmatpush1.bf16.msra.mxu0 0
        %1167 = vmatprep.subr.bf16.mxu0 0
        %1168 = vmatpush1.bf16.msra.mxu0 0
        %1169 = vmatprep.subr.bf16.mxu0 0
        %1170 = vmatpush1.bf16.msra.mxu0 0
        %1171 = vmatprep.subr.bf16.mxu0 0
        %1172 = vmatpush1.bf16.msra.mxu0 0
        %1173 = vmatprep.mubr.bf16.mxu0 0
        %1174 = vmatmul.mubr.bf16.gmra.mrb[0].mxu0 %v1033
        %v1175 = vpop.f32.mrb[0].mxu0
        %v1176 = vadd.f32 %v1054, %v1175
        %v1177 = vpop.f32.mrb[0].mxu0
        %v1178 = vadd.f32 %v1058, %v1177
        %v1179 = vpop.f32.mrb[0].mxu0
        %v1180 = vadd.f32 %v1054, %v1179
        %v1181 = vpop.f32.mrb[0].mxu0
        %v1182 = vadd.f32 %v1058, %v1181
        %1183 = vdwg.mxu0
        %v1184 = vxor.u32 %v1176, 2147483648
        %v1185 = vxor.u32 %v1178, 2147483648
        %v1186 = vxor.u32 %v1180, 2147483648
        %v1187 = vxor.u32 %v1182, 2147483648
        %v1188 = vmul.f32 %v1184, 1.442695
        %v1189 = vpow.pop %v1188
        %v1190 = vmul.f32 %v1185, 1.442695
        %v1191 = vpow.pop %v1190
        %v1192 = vmul.f32 %v1186, 1.442695
        %v1193 = vpow.pop %v1192
        %v1194 = vmul.f32 %v1187, 1.442695
        %v1195 = vpow.pop %v1194
        %v1196 = vadd.f32 %v1189, 1.0
        %v1197 = vadd.f32 %v1191, 1.0
        %v1198 = vadd.f32 %v1193, 1.0
        %v1199 = vadd.f32 %v1195, 1.0
        %v1200 = vrcp.pop %v1196
        %v1201 = vmul.f32 1.0, %v1200
        %v1202 = vrcp.pop %v1197
        %v1203 = vmul.f32 1.0, %v1202
        %v1204 = vrcp.pop %v1198
        %v1205 = vmul.f32 1.0, %v1204
        %v1206 = vrcp.pop %v1199
        %v1207 = vmul.f32 1.0, %v1206
        %v1208 = vpack.c.bf16 %v1205, %v1201
        %v1209 = vpack.c.bf16 %v1207, %v1203
        %v1212 = vunpack.c.l.b16 %v1208
        %v1213 = vunpack.c.l.b16 %v1209
        %v1214 = vunpack.c.h.b16 %v1208
        %v1215 = vunpack.c.h.b16 %v1209
        %v1216 = vpack.c.b16 %v1213, %v1212
        %v1217 = vpack.c.b16 %v1215, %v1214
        %1220 = vst [vmem:[%s465] sm:$0xff] %v1216
        %1221 = vst [vmem:[%s465 + $0x8] sm:$0xff] %v1217
        %s1222 = sand.u32 %s219, 1
        %s1223 = scalar_lea.sflag [#allocation4], %s1222
        %s1224 = sand.u32 %s219, 1
        %s1225 = smul.addr %s1224, 16
        %s1226 = scalar_lea.vmem [#allocation14], %s1225
        %s1227 = sand.u32 %s245, 1
        %s1228 = scalar_lea.sflag [#allocation16], %s1227
        %s1229 = sand.u32 %s245, 1
        %s1230 = smul.addr %s1229, 8
        %s1231 = scalar_lea.vmem [#allocation15], %s1230
        // Predicated region
        $region81: #{tpu_custom_call.1} parent=51 // pred_check
          %p1232 = pneg %p229
        $region82: #{tpu_custom_call.1} parent=51 // pred_check_branch
          %1234 = sbr.rel (%p1232) target = $region84
        $region83: #{tpu_custom_call.1} parent=51 // pred_region
          %s1235 = smul.u32 2, %s33
          %s1237 = ssub.s32 256, 256
          %1238 = vsyncadd %s1223, %s1237
          %s1239 = smul.addr %s1235, 2
          %s1240 = smul.addr %s1239, 64
          %s1241 = scalar_lea.hbm %s8, %s1240
          %s1242 = sshll.u32 %s1226, 4
          %s1243 = int_to_ptr.vmem [resolvable:$true] %s1242
          %1248 = dma.vmem_to_hbm [thread:$0]  %s1243, 256, %s1241, %s1223, 128, 128, 8
        $region84: #{tpu_custom_call.1} parent=51 // pred_fallthru
          _
        // Predicated region
        $region85: #{tpu_custom_call.1} parent=51 // pred_check
          %p1249 = pneg %p255
        $region86: #{tpu_custom_call.1} parent=51 // pred_check_branch
          %1251 = sbr.rel (%p1249) target = $region88
        $region87: #{tpu_custom_call.1} parent=51 // pred_region
          %s1252 = smul.u32 2, %s33
          %s1254 = ssub.s32 128, 128
          %1255 = vsyncadd %s1228, %s1254
          %s1256 = smul.addr %s1252, 64
          %s1257 = scalar_lea.hbm %s9, %s1256
          %s1258 = sshll.u32 %s1231, 4
          %s1259 = int_to_ptr.vmem [resolvable:$true] %s1258
          %1264 = dma.vmem_to_hbm [thread:$0]  %s1259, 128, %s1257, %s1228, 64, 64, 4
        $region88: #{tpu_custom_call.1} parent=51 // pred_fallthru
          _
      $region52: #{tpu_custom_call.1} parent=5 // pred_fallthru
        _
      %p1265 = scmp.le.s32.totalorder 2, %s28
      // Predicated region
      $region89: #{tpu_custom_call.1} parent=5 // pred_check
        %p1266 = pneg %p1265
      $region90: #{tpu_custom_call.1} parent=5 // pred_check_branch
        %1268 = sbr.rel (%p1266) target = $region92
      $region91: #{tpu_custom_call.1} parent=5 // pred_region
        %s1269 = ssub.s32 %s28, 2
        // Predicated region
        $region93: #{tpu_custom_call.1} parent=91 // pred_check
          %p1270 = pneg %p235
        $region94: #{tpu_custom_call.1} parent=91 // pred_check_branch
          %1272 = sbr.rel (%p1270) target = $region96
        $region95: #{tpu_custom_call.1} parent=91 // pred_region
          %s1273 = sand.u32 %s220, 1
          %s1274 = scalar_lea.sflag [#allocation4], %s1273
          %s1275 = sand.u32 %s220, 1
          %s1276 = smul.addr %s1275, 16
          %s1277 = scalar_lea.vmem [#allocation14], %s1276
          %1278 = dma.done %s1274, 256
        $region96: #{tpu_custom_call.1} parent=91 // pred_fallthru
          _
        // Predicated region
        $region97: #{tpu_custom_call.1} parent=91 // pred_check
          %p1279 = pneg %p261
        $region98: #{tpu_custom_call.1} parent=91 // pred_check_branch
          %1281 = sbr.rel (%p1279) target = $region100
        $region99: #{tpu_custom_call.1} parent=91 // pred_region
          %s1282 = sand.u32 %s246, 1
          %s1283 = scalar_lea.sflag [#allocation16], %s1282
          %s1284 = sand.u32 %s246, 1
          %s1285 = smul.addr %s1284, 8
          %s1286 = scalar_lea.vmem [#allocation15], %s1285
          %1287 = dma.done %s1283, 128
        $region100: #{tpu_custom_call.1} parent=91 // pred_fallthru
          _
      $region92: #{tpu_custom_call.1} parent=5 // pred_fallthru
        _
    $region6: #{tpu_custom_call.1} parent=1 // loop_footer
      %s32 = sadd.s32 1, %s28
    $region7: #{tpu_custom_call.1} parent=1 // loop_footer_branch
      %27 = sbr.rel target = $region3
    $region8: #{tpu_custom_call.1} parent=1 // loop_exit
      _
    %1288 = vsyncpa [#allocation3], 1
    %s1289 = scalar_lea.sflag [#allocation3], 1
    %1290 = vsyncpa %s1289, 1
    %1291 = vsyncpa [#allocation6], 1
    %1292 = vsyncpa [#allocation9], 1
    %1293 = vsyncpa [#allocation12], 1
    %1294 = vsyncpa [#allocation4], 1
    %s1295 = scalar_lea.sflag [#allocation4], 1
    %1296 = vsyncpa %s1295, 1
    %1297 = vsyncpa [#allocation16], 1
    %s1298 = scalar_lea.sflag [#allocation16], 1
    %1299 = vsyncpa %s1298, 1

</llo_original>
